<compile_context>
chip_gen: v7x
topology: tpu7x:2x2x1
jax: 0.10.0
libtpu: 0.0.40
codegen_flags: <defaults>
</compile_context>

<pallas_src>
import jax
import jax.numpy as jnp
from jax.experimental import pallas as pl
from jax.experimental.pallas import tpu as pltpu


# ---------------------------------------------------------------------------
# Kernel: one token block (single expert) x one F tile of that expert's weights
# ---------------------------------------------------------------------------
def _moe_gmm_kernel(be_ref, x_ref, w1_ref, w3_ref, w2_ref, rw_ref, out_ref, acc_ref):
    del be_ref  # scalar-prefetch table: consumed only by the BlockSpec index_maps
    f = pl.program_id(1)
    nf = pl.num_programs(1)

    @pl.when(f == 0)
    def _():
        acc_ref[...] = jnp.zeros_like(acc_ref)

    x = x_ref[...]          # (tt, H)  compute dtype
    w1 = w1_ref[0]          # (H, tf)
    w3 = w3_ref[0]          # (H, tf)
    w2 = w2_ref[0]          # (tf, H)
    rw = rw_ref[...]        # (tt, 1)  f32 routing weight (0 for padded rows)

    h1 = jnp.dot(x, w1, preferred_element_type=jnp.float32)     # (tt, tf) f32
    h3 = jnp.dot(x, w3, preferred_element_type=jnp.float32)     # (tt, tf) f32
    h = (h1 * jax.nn.sigmoid(h1)) * h3                           # SiLU gate, f32
    h = h * rw                                                   # fold routing weight pre-w2
    acc_ref[...] += jnp.dot(h.astype(w2_ref.dtype), w2,
                            preferred_element_type=jnp.float32)  # (tt, H) f32

    @pl.when(f == nf - 1)
    def _():
        out_ref[...] = acc_ref[...].astype(out_ref.dtype)


# ---------------------------------------------------------------------------
# Tiling helpers (generation-aware VMEM budget)
# ---------------------------------------------------------------------------
def _round_up(x, m):
    return ((x + m - 1) // m) * m


def _vmem_capacity_bytes():
    try:
        info = pltpu.get_tpu_info()
    except Exception:
        return 64 * 1024 * 1024  # conservative (v7x per-core VMEM)
    for name in ("vmem_capacity_bytes", "vmem_bytes", "vmem_size_bytes"):
        v = getattr(info, name, None)
        if isinstance(v, int) and v > 0:
            return v
    return 64 * 1024 * 1024


def _pick_tf(F, H, tt, wb, budget):
    """Largest 128-multiple divisor of F whose double-buffered weight tiles fit."""
    if F % 128 == 0:
        cands = [tf for tf in range(F, 127, -128) if F % tf == 0]
    else:
        cands = [F]  # odd F: use the full dim (no partial weight tiles -> stays correct)
    fixed = (2 * tt * H * wb      # x tile, double-buffered
             + 2 * tt * H * 4     # f32 output tile, double-buffered
             + 2 * tt * 128 * 4   # rw tile (lane-padded), double-buffered
             + tt * H * 4)        # f32 accumulator scratch
    for tf in cands:
        if fixed + 2 * 3 * H * tf * wb <= budget:  # w1/w3/w2 tiles, double-buffered
            return tf
    return cands[-1]


# ---------------------------------------------------------------------------
# Wrapper: router + grouping glue + pallas_call + scatter-add combine
# ---------------------------------------------------------------------------
def mixtral_moe_block(hidden_states, gate_w, w1, w2, w3, top_k):
    """hidden_states: (B,S,H); gate_w: (E,H); w1/w3: (E,H,F); w2: (E,F,H)."""
    B, S, H = hidden_states.shape
    T = B * S
    E, _, F = w1.shape
    out_dtype = hidden_states.dtype
    compute_dtype = w1.dtype
    wb = jnp.dtype(compute_dtype).itemsize

    x = hidden_states.reshape(T, H)

    # ---- router (f32): softmax + top-k + normalize --------------------------
    # TODO(synk): softmax/top_k/argsort routing has no clean Pallas equivalent; kept in JAX.
    x_f32 = x.astype(jnp.float32)
    logits = x_f32 @ gate_w.astype(jnp.float32).T               # (T, E)
    probs = jax.nn.softmax(logits, axis=-1)
    top_w, top_idx = jax.lax.top_k(probs, top_k)                # (T, k)
    top_w = top_w / jnp.sum(top_w, axis=-1, keepdims=True)

    # ---- generation-aware tile selection ------------------------------------
    vmem_cap = _vmem_capacity_bytes()
    vmem_limit = min(int(vmem_cap * 0.85), 110 * 2**20)         # ~56 MiB v7x, ~110 MiB v5e/v6e
    budget = min(int(vmem_cap * 0.78), 100 * 2**20)
    sub = 8 * (4 // wb)                                         # sublane multiple (8 f32 / 16 bf16)
    tt_target = 512 if vmem_cap >= 100 * 2**20 else 256
    tt = max(sub, min(tt_target, _round_up(T, sub)))            # decode-friendly token tile
    tf = _pick_tf(F, H, tt, wb, budget)
    nf = F // tf

    # ---- token -> expert grouping (sorted, block-aligned padding) -----------
    R = T * top_k
    flat_expert = top_idx.reshape(R).astype(jnp.int32)
    flat_token = jnp.repeat(jnp.arange(T, dtype=jnp.int32), top_k)
    flat_w = top_w.reshape(R).astype(jnp.float32)

    order = jnp.argsort(flat_expert)
    sorted_expert = flat_expert[order]
    sorted_token = flat_token[order]
    sorted_w = flat_w[order]

    group_sizes = jnp.bincount(flat_expert, length=E).astype(jnp.int32)   # (E,)
    padded_group = ((group_sizes + tt - 1) // tt) * tt
    padded_starts = jnp.cumsum(padded_group) - padded_group
    padded_ends = padded_starts + padded_group
    group_starts = jnp.cumsum(group_sizes) - group_sizes

    pos_in_group = jnp.arange(R, dtype=jnp.int32) - group_starts[sorted_expert]
    dest = (padded_starts[sorted_expert] + pos_in_group).astype(jnp.int32)

    cap = (R // tt + E) * tt          # static upper bound on block-aligned padded rows
    nb = cap // tt

    block_start = jnp.arange(nb, dtype=jnp.int32) * tt
    block_expert = jnp.sum((block_start[:, None] >= padded_ends[None, :]).astype(jnp.int32),
                           axis=1)
    block_expert = jnp.clip(block_expert, 0, E - 1).astype(jnp.int32)      # (nb,)

    x_c = x.astype(compute_dtype)
    x_sorted = jnp.zeros((cap, H), compute_dtype).at[dest].set(x_c[sorted_token])
    rw_sorted = jnp.zeros((cap, 1), jnp.float32).at[dest].set(sorted_w[:, None])

    # ---- grouped expert MLP kernel ------------------------------------------
    out_sorted = pl.pallas_call(
        _moe_gmm_kernel,
        out_shape=jax.ShapeDtypeStruct((cap, H), jnp.float32),
        grid_spec=pltpu.PrefetchScalarGridSpec(
            num_scalar_prefetch=1,
            grid=(nb, nf),
            in_specs=[
                pl.BlockSpec((tt, H), lambda b, f, be: (b, 0)),            # sorted tokens
                pl.BlockSpec((1, H, tf), lambda b, f, be: (be[b], 0, f)),  # w1[expert] F-tile
                pl.BlockSpec((1, H, tf), lambda b, f, be: (be[b], 0, f)),  # w3[expert] F-tile
                pl.BlockSpec((1, tf, H), lambda b, f, be: (be[b], f, 0)),  # w2[expert] F-tile
                pl.BlockSpec((tt, 1), lambda b, f, be: (b, 0)),            # routing weights
            ],
            out_specs=pl.BlockSpec((tt, H), lambda b, f, be: (b, 0)),
            scratch_shapes=[pltpu.VMEM((tt, H), jnp.float32)],
        ),
        compiler_params=pltpu.CompilerParams(
            dimension_semantics=("parallel", "arbitrary"),
            vmem_limit_bytes=vmem_limit,
        ),
    )(block_expert, x_sorted, w1, w3, w2, rw_sorted)

    # ---- combine the top_k expert contributions per token (f32) -------------
    contrib = out_sorted[dest]                                   # (R, H) f32
    combined = jnp.zeros((T, H), jnp.float32).at[sorted_token].add(contrib)
    return combined.astype(out_dtype).reshape(B, S, H)


# ---------------------------------------------------------------------------
# Pure-JAX reference mirroring the PyTorch forward semantics
# ---------------------------------------------------------------------------
def _reference_moe(hidden_states, gate_w, w1, w2, w3, top_k):
    B, S, H = hidden_states.shape
    T = B * S
    E = gate_w.shape[0]
    compute_dtype = w1.dtype
    x = hidden_states.reshape(T, H)
    x_f32 = x.astype(jnp.float32)
    logits = x_f32 @ gate_w.astype(jnp.float32).T
    probs = jax.nn.softmax(logits, axis=-1)
    top_w, top_idx = jax.lax.top_k(probs, top_k)
    top_w = top_w / jnp.sum(top_w, axis=-1, keepdims=True)
    xc = x.astype(compute_dtype)
    out = jnp.zeros((T, H), jnp.float32)
    for e in range(E):
        h1 = jnp.dot(xc, w1[e], preferred_element_type=jnp.float32)
        h3 = jnp.dot(xc, w3[e], preferred_element_type=jnp.float32)
        h = (h1 * jax.nn.sigmoid(h1)) * h3
        y = jnp.dot(h.astype(compute_dtype), w2[e], preferred_element_type=jnp.float32)
        w_e = jnp.sum(jnp.where(top_idx == e, top_w, 0.0), axis=-1, keepdims=True)
        out = out + w_e * y
    return out.astype(hidden_states.dtype).reshape(B, S, H)


if __name__ == "__main__":
    # Small Mixtral-style config.
    batch, seq = 2, 8
    hidden_size = 128          # config.hidden_size
    intermediate_size = 256    # config.intermediate_size
    num_experts = 8            # config.num_local_experts
    top_k = 2                  # config.num_experts_per_tok
    init_range = 0.02          # config.initializer_range

    key = jax.random.PRNGKey(0)
    k_x, k_g, k_w1, k_w2, k_w3 = jax.random.split(key, 5)

    hidden_states = jax.random.normal(k_x, (batch, seq, hidden_size), jnp.float32)
    gate_w = init_range * jax.random.normal(k_g, (num_experts, hidden_size), jnp.float32)
    # Stacked expert weights (moe_experts_weight{1,2,3} layouts), stored in bf16 in HBM.
    w1 = (init_range * jax.random.normal(
        k_w1, (num_experts, hidden_size, intermediate_size), jnp.float32)).astype(jnp.bfloat16)
    w2 = (init_range * jax.random.normal(
        k_w2, (num_experts, intermediate_size, hidden_size), jnp.float32)).astype(jnp.bfloat16)
    w3 = (init_range * jax.random.normal(
        k_w3, (num_experts, hidden_size, intermediate_size), jnp.float32)).astype(jnp.bfloat16)

    moe = jax.jit(lambda hs, gw, a, b, c: mixtral_moe_block(hs, gw, a, b, c, top_k))
    out = jax.block_until_ready(moe(hidden_states, gate_w, w1, w2, w3))

    ref = _reference_moe(hidden_states, gate_w, w1, w2, w3, top_k)
    assert out.shape == (batch, seq, hidden_size)
    max_diff = float(jnp.max(jnp.abs(out - ref)))
    assert jnp.allclose(out, ref, rtol=2e-2, atol=2e-4), f"max_diff={max_diff}"

    print("KERNEL_OK")
</pallas_src>

<mosaic_0001>
module attributes {stable_mosaic.version = 11 : i64} {
  func.func private @main(%arg0: i32) attributes {dimension_semantics = [#tpu.dimension_semantics<core_parallel>], iteration_bounds = array<i64: 2>, tpu.core_type = #tpu.core_type<sc_scalar_subcore>, window_params = []} {
    return
  }
}

module attributes {stable_mosaic.version = 11 : i64} {
  func.func private @main(%arg0: i32) attributes {dimension_semantics = [#tpu.dimension_semantics<core_parallel>], iteration_bounds = array<i64: 2>, tpu.core_type = #tpu.core_type<sc_scalar_subcore>, window_params = []} {
    return
  }
}

module attributes {stable_mosaic.version = 11 : i64} {
  func.func @_moe_gmm_kernel(%arg0: i32, %arg1: i32, %arg2: memref<10xi32, #tpu.memory_space<smem>>, %arg3: memref<16x128xbf16, #tpu.memory_space<vmem>>, %arg4: memref<1x128x256xbf16, #tpu.memory_space<vmem>>, %arg5: memref<1x128x256xbf16, #tpu.memory_space<vmem>>, %arg6: memref<1x256x128xbf16, #tpu.memory_space<vmem>>, %arg7: memref<16x1xf32, #tpu.memory_space<vmem>>, %arg8: memref<16x128xf32, #tpu.memory_space<vmem>>, %arg9: memref<16x128xf32, #tpu.memory_space<vmem>>) attributes {dimension_semantics = [#tpu.dimension_semantics<parallel>, #tpu.dimension_semantics<arbitrary>], iteration_bounds = array<i64: 10, 1>, scalar_prefetch = 1 : i64, scratch_operands = 1 : i64, tpu.core_type = #tpu.core_type<tc>, window_params = [{transform_indices = @transform_0, window_bounds = array<i64: 16, 128>}, {transform_indices = @transform_1, window_bounds = array<i64: 1, 128, 256>}, {transform_indices = @transform_2, window_bounds = array<i64: 1, 128, 256>}, {transform_indices = @transform_3, window_bounds = array<i64: 1, 256, 128>}, {transform_indices = @transform_4, window_bounds = array<i64: 16, 1>}, {transform_indices = @transform_5, window_bounds = array<i64: 16, 128>}]} {
    %c0_i32 = arith.constant 0 : i32
    %0 = arith.cmpi eq, %arg1, %c0_i32 : i32
    %1 = arith.extui %0 : i1 to i32
    %c0_i32_0 = arith.constant 0 : i32
    %2 = arith.cmpi ne, %1, %c0_i32_0 : i32
    scf.if %2 {
      %cst_22 = arith.constant 0.000000e+00 : f32
      %30 = vector.broadcast %cst_22 : f32 to vector<16x128xf32>
      %c0_23 = arith.constant 0 : index
      %c0_24 = arith.constant 0 : index
      %31 = vector.load %arg9[%c0_23, %c0_24] : memref<16x128xf32, #tpu.memory_space<vmem>>, vector<16x128xf32>
      tpu.vector_store %arg9[%c0_23, %c0_24], %30 {strides = array<i32>} : memref<16x128xf32, #tpu.memory_space<vmem>>, vector<16x128xf32>,
    } else {
    }
    %c0 = arith.constant 0 : index
    %c0_1 = arith.constant 0 : index
    %3 = vector.load %arg3[%c0, %c0_1] : memref<16x128xbf16, #tpu.memory_space<vmem>>, vector<16x128xbf16>
    %c0_2 = arith.constant 0 : index
    %c0_3 = arith.constant 0 : index
    %c0_4 = arith.constant 0 : index
    %4 = vector.load %arg4[%c0_2, %c0_3, %c0_4] : memref<1x128x256xbf16, #tpu.memory_space<vmem>>, vector<1x128x256xbf16>
    %5 = vector.shape_cast %4 : vector<1x128x256xbf16> to vector<128x256xbf16>
    %c0_5 = arith.constant 0 : index
    %c0_6 = arith.constant 0 : index
    %c0_7 = arith.constant 0 : index
    %6 = vector.load %arg5[%c0_5, %c0_6, %c0_7] : memref<1x128x256xbf16, #tpu.memory_space<vmem>>, vector<1x128x256xbf16>
    %7 = vector.shape_cast %6 : vector<1x128x256xbf16> to vector<128x256xbf16>
    %c0_8 = arith.constant 0 : index
    %c0_9 = arith.constant 0 : index
    %c0_10 = arith.constant 0 : index
    %8 = vector.load %arg6[%c0_8, %c0_9, %c0_10] : memref<1x256x128xbf16, #tpu.memory_space<vmem>>, vector<1x256x128xbf16>
    %9 = vector.shape_cast %8 : vector<1x256x128xbf16> to vector<256x128xbf16>
    %c0_11 = arith.constant 0 : index
    %c0_12 = arith.constant 0 : index
    %10 = vector.load %arg7[%c0_11, %c0_12] : memref<16x1xf32, #tpu.memory_space<vmem>>, vector<16x1xf32>
    %cst = arith.constant dense<0.000000e+00> : vector<16x256xf32>
    %11 = tpu.matmul %3, %5, %cst {dimension_numbers = #tpu.dot_dimension_numbers<[1], [0], [0], [1], [0, 0, 1, 1], [], []>} : vector<16x128xbf16>, vector<128x256xbf16>, vector<16x256xf32> -> vector<16x256xf32>
    %cst_13 = arith.constant dense<0.000000e+00> : vector<16x256xf32>
    %12 = tpu.matmul %3, %7, %cst_13 {dimension_numbers = #tpu.dot_dimension_numbers<[1], [0], [0], [1], [0, 0, 1, 1], [], []>} : vector<16x128xbf16>, vector<128x256xbf16>, vector<16x256xf32> -> vector<16x256xf32>
    %13 = arith.negf %11 : vector<16x256xf32>
    %14 = math.exp %13 : vector<16x256xf32>
    %cst_14 = arith.constant 1.000000e+00 : f32
    %15 = vector.broadcast %cst_14 : f32 to vector<16x256xf32>
    %16 = arith.addf %15, %14 : vector<16x256xf32>
    %17 = arith.divf %15, %16 : vector<16x256xf32>
    %18 = arith.mulf %11, %17 : vector<16x256xf32>
    %19 = arith.mulf %18, %12 : vector<16x256xf32>
    %20 = vector.broadcast %10 : vector<16x1xf32> to vector<16x256xf32>
    %21 = arith.mulf %19, %20 : vector<16x256xf32>
    %c0_15 = arith.constant 0 : index
    %c0_16 = arith.constant 0 : index
    %22 = vector.load %arg9[%c0_15, %c0_16] : memref<16x128xf32, #tpu.memory_space<vmem>>, vector<16x128xf32>
    %23 = arith.truncf %21 : vector<16x256xf32> to vector<16x256xbf16>
    %cst_17 = arith.constant dense<0.000000e+00> : vector<16x128xf32>
    %24 = tpu.matmul %23, %9, %cst_17 {dimension_numbers = #tpu.dot_dimension_numbers<[1], [0], [0], [1], [0, 0, 1, 1], [], []>} : vector<16x256xbf16>, vector<256x128xbf16>, vector<16x128xf32> -> vector<16x128xf32>
    %25 = arith.addf %22, %24 : vector<16x128xf32>
    %c0_18 = arith.constant 0 : index
    %c0_19 = arith.constant 0 : index
    %26 = vector.load %arg9[%c0_18, %c0_19] : memref<16x128xf32, #tpu.memory_space<vmem>>, vector<16x128xf32>
    tpu.vector_store %arg9[%c0_18, %c0_19], %25 {strides = array<i32>} : memref<16x128xf32, #tpu.memory_space<vmem>>, vector<16x128xf32>,
    %c0_i32_20 = arith.constant 0 : i32
    %27 = arith.cmpi eq, %arg1, %c0_i32_20 : i32
    %28 = arith.extui %27 : i1 to i32
    %c0_i32_21 = arith.constant 0 : i32
    %29 = arith.cmpi ne, %28, %c0_i32_21 : i32
    scf.if %29 {
      %c0_22 = arith.constant 0 : index
      %c0_23 = arith.constant 0 : index
      %30 = vector.load %arg9[%c0_22, %c0_23] : memref<16x128xf32, #tpu.memory_space<vmem>>, vector<16x128xf32>
      %c0_24 = arith.constant 0 : index
      %c0_25 = arith.constant 0 : index
      %31 = vector.load %arg8[%c0_24, %c0_25] : memref<16x128xf32, #tpu.memory_space<vmem>>, vector<16x128xf32>
      tpu.vector_store %arg8[%c0_24, %c0_25], %30 {strides = array<i32>} : memref<16x128xf32, #tpu.memory_space<vmem>>, vector<16x128xf32>,
    } else {
    }
    return
  }
  func.func @transform_0(%arg0: i32, %arg1: i32, %arg2: memref<10xi32, #tpu.memory_space<smem>>) -> (i32, i32) {
    %c0_i32 = arith.constant 0 : i32
    %c0_i32_0 = arith.constant 0 : i32
    return %arg0, %c0_i32 : i32, i32
  }
  func.func @transform_1(%arg0: i32, %arg1: i32, %arg2: memref<10xi32, #tpu.memory_space<smem>>) -> (i32, i32, i32) {
    %0 = arith.index_cast %arg0 : i32 to index
    %1 = memref.load %arg2[%0] : memref<10xi32, #tpu.memory_space<smem>>
    %c0_i32 = arith.constant 0 : i32
    %c0_i32_0 = arith.constant 0 : i32
    return %1, %c0_i32, %arg1 : i32, i32, i32
  }
  func.func @transform_2(%arg0: i32, %arg1: i32, %arg2: memref<10xi32, #tpu.memory_space<smem>>) -> (i32, i32, i32) {
    %0 = arith.index_cast %arg0 : i32 to index
    %1 = memref.load %arg2[%0] : memref<10xi32, #tpu.memory_space<smem>>
    %c0_i32 = arith.constant 0 : i32
    %c0_i32_0 = arith.constant 0 : i32
    return %1, %c0_i32, %arg1 : i32, i32, i32
  }
  func.func @transform_3(%arg0: i32, %arg1: i32, %arg2: memref<10xi32, #tpu.memory_space<smem>>) -> (i32, i32, i32) {
    %0 = arith.index_cast %arg0 : i32 to index
    %1 = memref.load %arg2[%0] : memref<10xi32, #tpu.memory_space<smem>>
    %c0_i32 = arith.constant 0 : i32
    %c0_i32_0 = arith.constant 0 : i32
    return %1, %arg1, %c0_i32 : i32, i32, i32
  }
  func.func @transform_4(%arg0: i32, %arg1: i32, %arg2: memref<10xi32, #tpu.memory_space<smem>>) -> (i32, i32) {
    %c0_i32 = arith.constant 0 : i32
    %c0_i32_0 = arith.constant 0 : i32
    return %arg0, %c0_i32 : i32, i32
  }
  func.func @transform_5(%arg0: i32, %arg1: i32, %arg2: memref<10xi32, #tpu.memory_space<smem>>) -> (i32, i32) {
    %c0_i32 = arith.constant 0 : i32
    %c0_i32_0 = arith.constant 0 : i32
    return %arg0, %c0_i32 : i32, i32
  }
}

</mosaic_0001>

<llo_original>
// kernel: _lambda_.1
$region0: #{_lambda_.1}
  #allocation0 [shape = 'u32[]', space=smem, size = 0x4, offset = 0x4, fixed_abs, tag = 'smem constant byte address 0x4 - core index']
  #allocation1 [shape = 'u32[144,128]{1,0:T(1,128)}', space=vmem, size = 0x12000, scoped, tag = 'internal scratch']
  #allocation2 [shape = 'f32[16,128]{1,0:T(8,128)}', space=vmem, size = 0x2000, scoped, tag = 'scratch operand']
  #allocation3 [shape = 's32[1]{0}', space=sflag, size = 0x4, scoped, tag = 'scoped memory for _lambda_.1']
  #allocation4 [shape = 'u8[512]{0}', space=smem, size = 0x200, scoped, tag = 'prefetched SMEM operand 0']
  %s0 = inlined_call_operand.vmem [shape: s32[10], index: 0, kind: input, shape index: {}]
  %s1 = inlined_call_operand.vmem [shape: bf16[160,128], index: 1, kind: input, shape index: {}]
  %s2 = inlined_call_operand.vmem [shape: bf16[8,128,256], index: 2, kind: input, shape index: {}]
  %s3 = inlined_call_operand.vmem [shape: bf16[8,128,256], index: 3, kind: input, shape index: {}]
  %s4 = inlined_call_operand.vmem [shape: bf16[8,256,128], index: 4, kind: input, shape index: {}]
  %s5 = inlined_call_operand.vmem [shape: f32[160,1], index: 5, kind: input, shape index: {}]
  %s6 = inlined_call_operand.vmem [shape: f32[160,128], index: 6, kind: output, shape index: {}]
  %s7 = sld [smem:[#allocation0]]
  $region61: #{_lambda_.1} parent=0
    _
  %s9 = ssub.s32 1, %s7
  %s10 = scalar_select 0, %s9, %s7
  %s11 = sshll.u32 %s0, 4
  %s12 = int_to_ptr.vmem [resolvable:$true] %s11
  %14 = dma.vmem_to_smem %s12, 16, [#allocation4], [#allocation3]
  %15 = dma.done [#allocation3], 16
  %16 = sfence
  loop: start=0, step=1, limit=12
  $region2: #{_lambda_.1} parent=0 // loop_pre_header
    _
  $region3: #{_lambda_.1} parent=0 // loop_header
    %s18 = sphi 0, %s22
    %p19 = scmp.ge.s32.totalorder %s18, 12
    %s25 = sphi 0, %s37
    %s26 = sphi 0, %s33
    %s27 = sphi 0, %s25
    %s28 = sphi 0, %s26
    %s29 = sphi 0, %s27
    %s30 = sphi 0, %s28
    %s40 = sphi 0, %s42
    %s43 = sphi 0, %s40
    %s44 = sphi 0, %s43
    %s60 = sphi 0, %s44
    %s70 = sphi 0, %s72
    %s73 = sphi 0, %s70
    %s74 = sphi 0, %s73
    %s90 = sphi 0, %s74
    %s100 = sphi 0, %s102
    %s103 = sphi 0, %s100
    %s104 = sphi 0, %s103
    %s120 = sphi 0, %s104
    %s130 = sphi 0, %s132
    %s133 = sphi 0, %s130
    %s134 = sphi 0, %s133
    %s150 = sphi 0, %s134
    %s156 = sphi 0, %s158
    %s159 = sphi 0, %s156
    %s160 = sphi 0, %s159
    %s176 = sphi 0, %s160
    %s182 = sphi 0, %s184
    %s185 = sphi 0, %s182
    %s186 = sphi 0, %s185
    %s202 = sphi 0, %s186
  $region4: #{_lambda_.1} parent=0 // loop_header_branch
    %21 = sbr.rel (%p19) target = $region8
  $region5: #{_lambda_.1} parent=0 // loop_body
    %s23 = ssub.s32 %s18, 1
    %s24 = ssub.s32 %s18, 2
    %s31 = sadd.s32 1, %s26
    %p32 = scmp.ge.s32.totalorder %s31, 1
    %s33 = scalar_select %p32, 0, %s31
    %s34 = sadd.s32 1, %s25
    %s35 = scalar_select %p32, %s34, %s25
    %p36 = scmp.ge.s32.totalorder %s35, 10
    %s37 = scalar_select %p36, 0, %s35
    %s38 = ssub.s32 %s25, %s37
    %p39 = scmp.eq.s32.totalorder %s38, 0
    %s41 = sadd.s32 %s40, 1
    %s42 = scalar_select %p39, %s40, %s41
    %p45 = pneg %p39
    %p46 = scmp.eq.s32.totalorder %s18, 9
    %p47 = por %p45, %p46
    %p48 = scmp.ne.s32.totalorder %s40, %s43
    %p49 = scmp.eq.s32.totalorder %s18, 0
    %p50 = por %p48, %p49
    %p51 = scmp.ne.s32.totalorder %s40, %s43
    %p52 = scmp.eq.s32.totalorder %s23, 9
    %p53 = por %p51, %p52
    %p54 = scmp.ne.s32.totalorder %s43, %s44
    %p55 = scmp.eq.s32.totalorder %s23, 0
    %p56 = por %p54, %p55
    %p57 = scmp.ne.s32.totalorder %s43, %s44
    %p58 = scmp.eq.s32.totalorder %s24, 9
    %p59 = por %p57, %p58
    %p61 = scmp.ne.s32.totalorder %s44, %s60
    %p62 = scmp.eq.s32.totalorder %s24, 0
    %p63 = por %p61, %p62
    %s64 = sld [smem:[#allocation4 + %s25]]
    %s65 = sld [smem:[#allocation4 + %s37]]
    %s66 = ssub.s32 %s64, %s65
    %s67 = ssub.s32 %s26, %s33
    %s68 = sor.u32 %s66, %s67
    %p69 = scmp.eq.s32.totalorder %s68, 0
    %s71 = sadd.s32 %s70, 1
    %s72 = scalar_select %p69, %s70, %s71
    %p75 = pneg %p69
    %p76 = scmp.eq.s32.totalorder %s18, 9
    %p77 = por %p75, %p76
    %p78 = scmp.ne.s32.totalorder %s70, %s73
    %p79 = scmp.eq.s32.totalorder %s18, 0
    %p80 = por %p78, %p79
    %p81 = scmp.ne.s32.totalorder %s70, %s73
    %p82 = scmp.eq.s32.totalorder %s23, 9
    %p83 = por %p81, %p82
    %p84 = scmp.ne.s32.totalorder %s73, %s74
    %p85 = scmp.eq.s32.totalorder %s23, 0
    %p86 = por %p84, %p85
    %p87 = scmp.ne.s32.totalorder %s73, %s74
    %p88 = scmp.eq.s32.totalorder %s24, 9
    %p89 = por %p87, %p88
    %p91 = scmp.ne.s32.totalorder %s74, %s90
    %p92 = scmp.eq.s32.totalorder %s24, 0
    %p93 = por %p91, %p92
    %s94 = sld [smem:[#allocation4 + %s25]]
    %s95 = sld [smem:[#allocation4 + %s37]]
    %s96 = ssub.s32 %s94, %s95
    %s97 = ssub.s32 %s26, %s33
    %s98 = sor.u32 %s96, %s97
    %p99 = scmp.eq.s32.totalorder %s98, 0
    %s101 = sadd.s32 %s100, 1
    %s102 = scalar_select %p99, %s100, %s101
    %p105 = pneg %p99
    %p106 = scmp.eq.s32.totalorder %s18, 9
    %p107 = por %p105, %p106
    %p108 = scmp.ne.s32.totalorder %s100, %s103
    %p109 = scmp.eq.s32.totalorder %s18, 0
    %p110 = por %p108, %p109
    %p111 = scmp.ne.s32.totalorder %s100, %s103
    %p112 = scmp.eq.s32.totalorder %s23, 9
    %p113 = por %p111, %p112
    %p114 = scmp.ne.s32.totalorder %s103, %s104
    %p115 = scmp.eq.s32.totalorder %s23, 0
    %p116 = por %p114, %p115
    %p117 = scmp.ne.s32.totalorder %s103, %s104
    %p118 = scmp.eq.s32.totalorder %s24, 9
    %p119 = por %p117, %p118
    %p121 = scmp.ne.s32.totalorder %s104, %s120
    %p122 = scmp.eq.s32.totalorder %s24, 0
    %p123 = por %p121, %p122
    %s124 = sld [smem:[#allocation4 + %s25]]
    %s125 = sld [smem:[#allocation4 + %s37]]
    %s126 = ssub.s32 %s124, %s125
    %s127 = ssub.s32 %s26, %s33
    %s128 = sor.u32 %s126, %s127
    %p129 = scmp.eq.s32.totalorder %s128, 0
    %s131 = sadd.s32 %s130, 1
    %s132 = scalar_select %p129, %s130, %s131
    %p135 = pneg %p129
    %p136 = scmp.eq.s32.totalorder %s18, 9
    %p137 = por %p135, %p136
    %p138 = scmp.ne.s32.totalorder %s130, %s133
    %p139 = scmp.eq.s32.totalorder %s18, 0
    %p140 = por %p138, %p139
    %p141 = scmp.ne.s32.totalorder %s130, %s133
    %p142 = scmp.eq.s32.totalorder %s23, 9
    %p143 = por %p141, %p142
    %p144 = scmp.ne.s32.totalorder %s133, %s134
    %p145 = scmp.eq.s32.totalorder %s23, 0
    %p146 = por %p144, %p145
    %p147 = scmp.ne.s32.totalorder %s133, %s134
    %p148 = scmp.eq.s32.totalorder %s24, 9
    %p149 = por %p147, %p148
    %p151 = scmp.ne.s32.totalorder %s134, %s150
    %p152 = scmp.eq.s32.totalorder %s24, 0
    %p153 = por %p151, %p152
    %s154 = ssub.s32 %s25, %s37
    %p155 = scmp.eq.s32.totalorder %s154, 0
    %s157 = sadd.s32 %s156, 1
    %s158 = scalar_select %p155, %s156, %s157
    %p161 = pneg %p155
    %p162 = scmp.eq.s32.totalorder %s18, 9
    %p163 = por %p161, %p162
    %p164 = scmp.ne.s32.totalorder %s156, %s159
    %p165 = scmp.eq.s32.totalorder %s18, 0
    %p166 = por %p164, %p165
    %p167 = scmp.ne.s32.totalorder %s156, %s159
    %p168 = scmp.eq.s32.totalorder %s23, 9
    %p169 = por %p167, %p168
    %p170 = scmp.ne.s32.totalorder %s159, %s160
    %p171 = scmp.eq.s32.totalorder %s23, 0
    %p172 = por %p170, %p171
    %p173 = scmp.ne.s32.totalorder %s159, %s160
    %p174 = scmp.eq.s32.totalorder %s24, 9
    %p175 = por %p173, %p174
    %p177 = scmp.ne.s32.totalorder %s160, %s176
    %p178 = scmp.eq.s32.totalorder %s24, 0
    %p179 = por %p177, %p178
    %s180 = ssub.s32 %s25, %s37
    %p181 = scmp.eq.s32.totalorder %s180, 0
    %s183 = sadd.s32 %s182, 1
    %s184 = scalar_select %p181, %s182, %s183
    %p187 = pneg %p181
    %p188 = scmp.eq.s32.totalorder %s18, 9
    %p189 = por %p187, %p188
    %p190 = scmp.ne.s32.totalorder %s182, %s185
    %p191 = scmp.eq.s32.totalorder %s18, 0
    %p192 = por %p190, %p191
    %p193 = scmp.ne.s32.totalorder %s182, %s185
    %p194 = scmp.eq.s32.totalorder %s23, 9
    %p195 = por %p193, %p194
    %p196 = scmp.ne.s32.totalorder %s185, %s186
    %p197 = scmp.eq.s32.totalorder %s23, 0
    %p198 = por %p196, %p197
    %p199 = scmp.ne.s32.totalorder %s185, %s186
    %p200 = scmp.eq.s32.totalorder %s24, 9
    %p201 = por %p199, %p200
    %p203 = scmp.ne.s32.totalorder %s186, %s202
    %p204 = scmp.eq.s32.totalorder %s24, 0
    %p205 = por %p203, %p204
    %p206 = scmp.le.s32.totalorder 1, %s18
    %p207 = scmp.lt.s32.totalorder %s18, 11
    %p208 = pnand %p206, %p207
    %p209 = pneg %p208
    // Predicated region
    $region9: #{_lambda_.1} parent=5 // pred_check
      _
    $region10: #{_lambda_.1} parent=5 // pred_check_branch
      %211 = sbr.rel (%p208) target = $region12
    $region11: #{_lambda_.1} parent=5 // pred_region
      %s212 = ssub.s32 %s18, 1
    $region12: #{_lambda_.1} parent=5 // pred_fallthru
      _
    %p213 = scmp.lt.s32.totalorder %s18, 10
    // Predicated region
    $region13: #{_lambda_.1} parent=5 // pred_check
      %p214 = pneg %p213
    $region14: #{_lambda_.1} parent=5 // pred_check_branch
      %216 = sbr.rel (%p214) target = $region16
    $region15: #{_lambda_.1} parent=5 // pred_region
      // Predicated region
      $region17: #{_lambda_.1} parent=15 // pred_check
        %p217 = pneg %p50
      $region18: #{_lambda_.1} parent=15 // pred_check_branch
        %219 = sbr.rel (%p217) target = $region20
      $region19: #{_lambda_.1} parent=15 // pred_region
        %s220 = smul.u32 2, %s25
        %p221 = scmp.lt.s32.totalorder %s220, 19
        %s222 = scalar_select %p221, %s220, 19
        %s223 = smul.addr %s222, 4
        %s224 = scalar_lea.vmem %s1, %s223
        %s225 = smul.u32 2, %s25
      $region20: #{_lambda_.1} parent=15 // pred_fallthru
        _
      // Predicated region
      $region21: #{_lambda_.1} parent=15 // pred_check
        %p226 = pneg %p80
      $region22: #{_lambda_.1} parent=15 // pred_check_branch
        %228 = sbr.rel (%p226) target = $region24
      $region23: #{_lambda_.1} parent=15 // pred_region
        %s229 = sld [smem:[#allocation4 + %s25]]
        %s230 = smul.u32 2, %s26
        %p231 = scmp.lt.s32.totalorder %s229, 7
        %s232 = scalar_select %p231, %s229, 7
        %p233 = scmp.lt.s32.totalorder %s230, 1
        %s234 = scalar_select %p233, %s230, 1
        %s235 = smul.addr %s232, 32
        %s236 = sadd.s32 %s234, %s235
        %s237 = smul.addr %s236, 4
        %s238 = scalar_lea.vmem %s2, %s237
        %s239 = sld [smem:[#allocation4 + %s25]]
        %s240 = smul.u32 2, %s26
      $region24: #{_lambda_.1} parent=15 // pred_fallthru
        _
      // Predicated region
      $region25: #{_lambda_.1} parent=15 // pred_check
        %p241 = pneg %p110
      $region26: #{_lambda_.1} parent=15 // pred_check_branch
        %243 = sbr.rel (%p241) target = $region28
      $region27: #{_lambda_.1} parent=15 // pred_region
        %s244 = sld [smem:[#allocation4 + %s25]]
        %s245 = smul.u32 2, %s26
        %p246 = scmp.lt.s32.totalorder %s244, 7
        %s247 = scalar_select %p246, %s244, 7
        %p248 = scmp.lt.s32.totalorder %s245, 1
        %s249 = scalar_select %p248, %s245, 1
        %s250 = smul.addr %s247, 32
        %s251 = sadd.s32 %s249, %s250
        %s252 = smul.addr %s251, 4
        %s253 = scalar_lea.vmem %s3, %s252
        %s254 = sld [smem:[#allocation4 + %s25]]
        %s255 = smul.u32 2, %s26
      $region28: #{_lambda_.1} parent=15 // pred_fallthru
        _
      // Predicated region
      $region29: #{_lambda_.1} parent=15 // pred_check
        %p256 = pneg %p140
      $region30: #{_lambda_.1} parent=15 // pred_check_branch
        %258 = sbr.rel (%p256) target = $region32
      $region31: #{_lambda_.1} parent=15 // pred_region
        %s259 = sld [smem:[#allocation4 + %s25]]
        %s260 = smul.u32 32, %s26
        %p261 = scmp.lt.s32.totalorder %s259, 7
        %s262 = scalar_select %p261, %s259, 7
        %p263 = scmp.lt.s32.totalorder %s260, 31
        %s264 = scalar_select %p263, %s260, 31
        %s265 = smul.addr %s262, 32
        %s266 = sadd.s32 %s264, %s265
        %s267 = smul.addr %s266, 4
        %s268 = scalar_lea.vmem %s4, %s267
        %s269 = sld [smem:[#allocation4 + %s25]]
        %s270 = smul.u32 32, %s26
      $region32: #{_lambda_.1} parent=15 // pred_fallthru
        _
      // Predicated region
      $region33: #{_lambda_.1} parent=15 // pred_check
        %p271 = pneg %p166
      $region34: #{_lambda_.1} parent=15 // pred_check_branch
        %273 = sbr.rel (%p271) target = $region36
      $region35: #{_lambda_.1} parent=15 // pred_region
        %s274 = smul.u32 2, %s25
        %p275 = scmp.lt.s32.totalorder %s274, 19
        %s276 = scalar_select %p275, %s274, 19
        %s277 = smul.addr %s276, 8
        %s278 = scalar_lea.vmem %s5, %s277
        %s279 = smul.u32 2, %s25
      $region36: #{_lambda_.1} parent=15 // pred_fallthru
        _
    $region16: #{_lambda_.1} parent=5 // pred_fallthru
      _
    %p280 = scmp.le.s32.totalorder 1, %s18
    %p281 = scmp.lt.s32.totalorder %s18, 11
    %p282 = pnand %p280, %p281
    %p283 = pneg %p282
    // Predicated region
    $region37: #{_lambda_.1} parent=5 // pred_check
      _
    $region38: #{_lambda_.1} parent=5 // pred_check_branch
      %285 = sbr.rel (%p282) target = $region40
    $region39: #{_lambda_.1} parent=5 // pred_region
      %s286 = ssub.s32 %s18, 1
      %s287 = smul.u32 2, %s27
      %p288 = scmp.lt.s32.totalorder %s287, 19
      %s289 = scalar_select %p288, %s287, 19
      %s290 = smul.addr %s289, 4
      %s291 = scalar_lea.vmem %s1, %s290
      %p292 = pneg %p56
      %p293 = pneg %p53
      %s294 = sld [smem:[#allocation4 + %s27]]
      %s295 = smul.u32 2, %s28
      %p296 = scmp.lt.s32.totalorder %s294, 7
      %s297 = scalar_select %p296, %s294, 7
      %p298 = scmp.lt.s32.totalorder %s295, 1
      %s299 = scalar_select %p298, %s295, 1
      %s300 = smul.addr %s297, 32
      %s301 = sadd.s32 %s299, %s300
      %s302 = smul.addr %s301, 4
      %s303 = scalar_lea.vmem %s2, %s302
      %p304 = pneg %p86
      %p305 = pneg %p83
      %s306 = sld [smem:[#allocation4 + %s27]]
      %s307 = smul.u32 2, %s28
      %p308 = scmp.lt.s32.totalorder %s306, 7
      %s309 = scalar_select %p308, %s306, 7
      %p310 = scmp.lt.s32.totalorder %s307, 1
      %s311 = scalar_select %p310, %s307, 1
      %s312 = smul.addr %s309, 32
      %s313 = sadd.s32 %s311, %s312
      %s314 = smul.addr %s313, 4
      %s315 = scalar_lea.vmem %s3, %s314
      %p316 = pneg %p116
      %p317 = pneg %p113
      %s318 = sld [smem:[#allocation4 + %s27]]
      %s319 = smul.u32 32, %s28
      %p320 = scmp.lt.s32.totalorder %s318, 7
      %s321 = scalar_select %p320, %s318, 7
      %p322 = scmp.lt.s32.totalorder %s319, 31
      %s323 = scalar_select %p322, %s319, 31
      %s324 = smul.addr %s321, 32
      %s325 = sadd.s32 %s323, %s324
      %s326 = smul.addr %s325, 4
      %s327 = scalar_lea.vmem %s4, %s326
      %p328 = pneg %p146
      %p329 = pneg %p143
      %s330 = smul.u32 2, %s27
      %p331 = scmp.lt.s32.totalorder %s330, 19
      %s332 = scalar_select %p331, %s330, 19
      %s333 = smul.addr %s332, 8
      %s334 = scalar_lea.vmem %s5, %s333
      %p335 = pneg %p172
      %p336 = pneg %p169
      %p337 = pneg %p198
      %p338 = pneg %p195
      %s339 = smul.u32 2, %s27
      %p340 = scmp.lt.s32.totalorder %s339, 19
      %s341 = scalar_select %p340, %s339, 19
      %s342 = smul.addr %s341, 8
      %s343 = scalar_lea.vmem %s6, %s342
      %s344 = smul.u32 2, %s27
      %p345 = scmp.lt.s32.totalorder %s344, 19
      %s346 = scalar_select %p345, %s344, 19
      %s347 = smul.addr %s346, 4
      %s348 = scalar_lea.vmem %s1, %s347
      %s349 = smul.u32 2, %s27
      %s350 = sld [smem:[#allocation4 + %s27]]
      %s351 = smul.u32 2, %s28
      %p352 = scmp.lt.s32.totalorder %s350, 7
      %s353 = scalar_select %p352, %s350, 7
      %p354 = scmp.lt.s32.totalorder %s351, 1
      %s355 = scalar_select %p354, %s351, 1
      %s356 = smul.addr %s353, 32
      %s357 = sadd.s32 %s355, %s356
      %s358 = smul.addr %s357, 4
      %s359 = scalar_lea.vmem %s2, %s358
      %s360 = sld [smem:[#allocation4 + %s27]]
      %s361 = smul.u32 2, %s28
      %s362 = sld [smem:[#allocation4 + %s27]]
      %s363 = smul.u32 2, %s28
      %p364 = scmp.lt.s32.totalorder %s362, 7
      %s365 = scalar_select %p364, %s362, 7
      %p366 = scmp.lt.s32.totalorder %s363, 1
      %s367 = scalar_select %p366, %s363, 1
      %s368 = smul.addr %s365, 32
      %s369 = sadd.s32 %s367, %s368
      %s370 = smul.addr %s369, 4
      %s371 = scalar_lea.vmem %s3, %s370
      %s372 = sld [smem:[#allocation4 + %s27]]
      %s373 = smul.u32 2, %s28
      %s374 = sld [smem:[#allocation4 + %s27]]
      %s375 = smul.u32 32, %s28
      %p376 = scmp.lt.s32.totalorder %s374, 7
      %s377 = scalar_select %p376, %s374, 7
      %p378 = scmp.lt.s32.totalorder %s375, 31
      %s379 = scalar_select %p378, %s375, 31
      %s380 = smul.addr %s377, 32
      %s381 = sadd.s32 %s379, %s380
      %s382 = smul.addr %s381, 4
      %s383 = scalar_lea.vmem %s4, %s382
      %s384 = sld [smem:[#allocation4 + %s27]]
      %s385 = smul.u32 32, %s28
      %s386 = smul.u32 2, %s27
      %p387 = scmp.lt.s32.totalorder %s386, 19
      %s388 = scalar_select %p387, %s386, 19
      %s389 = smul.addr %s388, 8
      %s390 = scalar_lea.vmem %s5, %s389
      %s391 = smul.u32 2, %s27
      %s392 = smul.u32 2, %s27
      %p393 = scmp.lt.s32.totalorder %s392, 19
      %s394 = scalar_select %p393, %s392, 19
      %s395 = smul.addr %s394, 8
      %s396 = scalar_lea.vmem %s6, %s395
      %s397 = smul.u32 2, %s27
      %p399 = scmp.eq.s32.totalorder %s28, 0
      // Predicated region
      $region41: #{_lambda_.1} parent=39 // pred_check
        %p400 = pneg %p399
      $region42: #{_lambda_.1} parent=39 // pred_check_branch
        %402 = sbr.rel (%p400) target = $region44
      $region43: #{_lambda_.1} parent=39 // pred_region
        %403 = vst [vmem:[#allocation2] sm:$0xff] 0.0
        %404 = vst [vmem:[#allocation2 + $0x8] sm:$0xff] 0.0
      $region44: #{_lambda_.1} parent=39 // pred_fallthru
        _
      %v405 = vld [vmem:[%s348] sm:$0xf]
      %v406 = vld [vmem:[%s348 + $0x4] sm:$0xf]
      %v407 = vld [vmem:[%s359] sm:$0xff]
      %v408 = vld [vmem:[%s359 + $0x8] sm:$0xff]
      %v409 = vld [vmem:[%s359 + $0x10] sm:$0xff]
      %v410 = vld [vmem:[%s359 + $0x18] sm:$0xff]
      %v411 = vld [vmem:[%s359 + $0x20] sm:$0xff]
      %v412 = vld [vmem:[%s359 + $0x28] sm:$0xff]
      %v413 = vld [vmem:[%s359 + $0x30] sm:$0xff]
      %v414 = vld [vmem:[%s359 + $0x38] sm:$0xff]
      %v415 = vld [vmem:[%s359 + $0x40] sm:$0xff]
      %v416 = vld [vmem:[%s359 + $0x48] sm:$0xff]
      %v417 = vld [vmem:[%s359 + $0x50] sm:$0xff]
      %v418 = vld [vmem:[%s359 + $0x58] sm:$0xff]
      %v419 = vld [vmem:[%s359 + $0x60] sm:$0xff]
      %v420 = vld [vmem:[%s359 + $0x68] sm:$0xff]
      %v421 = vld [vmem:[%s359 + $0x70] sm:$0xff]
      %v422 = vld [vmem:[%s359 + $0x78] sm:$0xff]
      %v423 = vld [vmem:[%s371] sm:$0xff]
      %v424 = vld [vmem:[%s371 + $0x8] sm:$0xff]
      %v425 = vld [vmem:[%s371 + $0x10] sm:$0xff]
      %v426 = vld [vmem:[%s371 + $0x18] sm:$0xff]
      %v427 = vld [vmem:[%s371 + $0x20] sm:$0xff]
      %v428 = vld [vmem:[%s371 + $0x28] sm:$0xff]
      %v429 = vld [vmem:[%s371 + $0x30] sm:$0xff]
      %v430 = vld [vmem:[%s371 + $0x38] sm:$0xff]
      %v431 = vld [vmem:[%s371 + $0x40] sm:$0xff]
      %v432 = vld [vmem:[%s371 + $0x48] sm:$0xff]
      %v433 = vld [vmem:[%s371 + $0x50] sm:$0xff]
      %v434 = vld [vmem:[%s371 + $0x58] sm:$0xff]
      %v435 = vld [vmem:[%s371 + $0x60] sm:$0xff]
      %v436 = vld [vmem:[%s371 + $0x68] sm:$0xff]
      %v437 = vld [vmem:[%s371 + $0x70] sm:$0xff]
      %v438 = vld [vmem:[%s371 + $0x78] sm:$0xff]
      %v439 = vld [vmem:[%s383] sm:$0xf]
      %v440 = vld [vmem:[%s383 + $0x4] sm:$0xf]
      %v441 = vld [vmem:[%s383 + $0x8] sm:$0xf]
      %v442 = vld [vmem:[%s383 + $0xc] sm:$0xf]
      %v443 = vld [vmem:[%s383 + $0x10] sm:$0xf]
      %v444 = vld [vmem:[%s383 + $0x14] sm:$0xf]
      %v445 = vld [vmem:[%s383 + $0x18] sm:$0xf]
      %v446 = vld [vmem:[%s383 + $0x1c] sm:$0xf]
      %v447 = vld [vmem:[%s383 + $0x20] sm:$0xf]
      %v448 = vld [vmem:[%s383 + $0x24] sm:$0xf]
      %v449 = vld [vmem:[%s383 + $0x28] sm:$0xf]
      %v450 = vld [vmem:[%s383 + $0x2c] sm:$0xf]
      %v451 = vld [vmem:[%s383 + $0x30] sm:$0xf]
      %v452 = vld [vmem:[%s383 + $0x34] sm:$0xf]
      %v453 = vld [vmem:[%s383 + $0x38] sm:$0xf]
      %v454 = vld [vmem:[%s383 + $0x3c] sm:$0xf]
      %v455 = vld [vmem:[%s383 + $0x40] sm:$0xf]
      %v456 = vld [vmem:[%s383 + $0x44] sm:$0xf]
      %v457 = vld [vmem:[%s383 + $0x48] sm:$0xf]
      %v458 = vld [vmem:[%s383 + $0x4c] sm:$0xf]
      %v459 = vld [vmem:[%s383 + $0x50] sm:$0xf]
      %v460 = vld [vmem:[%s383 + $0x54] sm:$0xf]
      %v461 = vld [vmem:[%s383 + $0x58] sm:$0xf]
      %v462 = vld [vmem:[%s383 + $0x5c] sm:$0xf]
      %v463 = vld [vmem:[%s383 + $0x60] sm:$0xf]
      %v464 = vld [vmem:[%s383 + $0x64] sm:$0xf]
      %v465 = vld [vmem:[%s383 + $0x68] sm:$0xf]
      %v466 = vld [vmem:[%s383 + $0x6c] sm:$0xf]
      %v467 = vld [vmem:[%s383 + $0x70] sm:$0xf]
      %v468 = vld [vmem:[%s383 + $0x74] sm:$0xf]
      %v469 = vld [vmem:[%s383 + $0x78] sm:$0xf]
      %v470 = vld [vmem:[%s383 + $0x7c] sm:$0xf]
      %v471 = vld [vmem:[%s390] sm:$0xff]
      %v472 = vld [vmem:[%s390 + $0x8] sm:$0xff]
      %v475 = vunpack.c.l.b16 %v405
      %v476 = vunpack.c.l.b16 %v406
      %v477 = vpack.c.b16 %v476, %v475
      %v495 = vunpack.c.l.b16 %v407
      %v496 = vunpack.c.h.b16 %v407
      %v497 = vunpack.c.l.b16 %v408
      %v498 = vunpack.c.h.b16 %v408
      %v499 = vunpack.c.l.b16 %v409
      %v500 = vunpack.c.h.b16 %v409
      %v501 = vunpack.c.l.b16 %v410
      %v502 = vunpack.c.h.b16 %v410
      %v503 = vunpack.c.l.b16 %v411
      %v504 = vunpack.c.h.b16 %v411
      %v505 = vunpack.c.l.b16 %v412
      %v506 = vunpack.c.h.b16 %v412
      %v507 = vunpack.c.l.b16 %v413
      %v508 = vunpack.c.h.b16 %v413
      %v509 = vunpack.c.l.b16 %v414
      %v510 = vunpack.c.h.b16 %v414
      %v511 = vunpack.c.l.b16 %v415
      %v512 = vunpack.c.h.b16 %v415
      %v513 = vunpack.c.l.b16 %v416
      %v514 = vunpack.c.h.b16 %v416
      %v515 = vunpack.c.l.b16 %v417
      %v516 = vunpack.c.h.b16 %v417
      %v517 = vunpack.c.l.b16 %v418
      %v518 = vunpack.c.h.b16 %v418
      %v519 = vunpack.c.l.b16 %v419
      %v520 = vunpack.c.h.b16 %v419
      %v521 = vunpack.c.l.b16 %v420
      %v522 = vunpack.c.h.b16 %v420
      %v523 = vunpack.c.l.b16 %v421
      %v524 = vunpack.c.h.b16 %v421
      %v525 = vunpack.c.l.b16 %v422
      %v526 = vunpack.c.h.b16 %v422
      %v527 = vpack.c.b16 %v497, %v495
      %v528 = vpack.c.b16 %v498, %v496
      %v529 = vpack.c.b16 %v501, %v499
      %v530 = vpack.c.b16 %v502, %v500
      %v531 = vpack.c.b16 %v505, %v503
      %v532 = vpack.c.b16 %v506, %v504
      %v533 = vpack.c.b16 %v509, %v507
      %v534 = vpack.c.b16 %v510, %v508
      %v535 = vpack.c.b16 %v513, %v511
      %v536 = vpack.c.b16 %v514, %v512
      %v537 = vpack.c.b16 %v517, %v515
      %v538 = vpack.c.b16 %v518, %v516
      %v539 = vpack.c.b16 %v521, %v519
      %v540 = vpack.c.b16 %v522, %v520
      %v541 = vpack.c.b16 %v525, %v523
      %v542 = vpack.c.b16 %v526, %v524
      %559 = vmatprep.subr.bf16.mxu0 %v528
      %560 = vmatpush1.bf16.msra.mxu0 %v527
      %561 = vmatprep.subr.bf16.mxu0 %v530
      %562 = vmatpush1.bf16.msra.mxu0 %v529
      %563 = vmatprep.subr.bf16.mxu0 %v532
      %564 = vmatpush1.bf16.msra.mxu0 %v531
      %565 = vmatprep.subr.bf16.mxu0 %v534
      %566 = vmatpush1.bf16.msra.mxu0 %v533
      %567 = vmatprep.subr.bf16.mxu0 %v536
      %568 = vmatpush1.bf16.msra.mxu0 %v535
      %569 = vmatprep.subr.bf16.mxu0 %v538
      %570 = vmatpush1.bf16.msra.mxu0 %v537
      %571 = vmatprep.subr.bf16.mxu0 %v540
      %572 = vmatpush1.bf16.msra.mxu0 %v539
      %573 = vmatprep.subr.bf16.mxu0 %v542
      %574 = vmatpush1.bf16.msra.mxu0 %v541
      %575 = vmatprep.subr.bf16.mxu0 0
      %576 = vmatpush1.bf16.msra.mxu0 0
      %577 = vmatprep.subr.bf16.mxu0 0
      %578 = vmatpush1.bf16.msra.mxu0 0
      %579 = vmatprep.subr.bf16.mxu0 0
      %580 = vmatpush1.bf16.msra.mxu0 0
      %581 = vmatprep.subr.bf16.mxu0 0
      %582 = vmatpush1.bf16.msra.mxu0 0
      %583 = vmatprep.subr.bf16.mxu0 0
      %584 = vmatpush1.bf16.msra.mxu0 0
      %585 = vmatprep.subr.bf16.mxu0 0
      %586 = vmatpush1.bf16.msra.mxu0 0
      %587 = vmatprep.subr.bf16.mxu0 0
      %588 = vmatpush1.bf16.msra.mxu0 0
      %589 = vmatprep.subr.bf16.mxu0 0
      %590 = vmatpush1.bf16.msra.mxu0 0
      %591 = vmatprep.mubr.bf16.mxu0 0
      %592 = vmatmul.mubr.bf16.gmra.mrb[0].mxu0 %v477
      %v593 = vpop.f32.mrb[0].mxu0
      %v594 = vadd.f32 0.0, %v593
      %v595 = vpop.f32.mrb[0].mxu0
      %v596 = vadd.f32 0.0, %v595
      %v597 = vpop.f32.mrb[0].mxu0
      %v598 = vadd.f32 0.0, %v597
      %v599 = vpop.f32.mrb[0].mxu0
      %v600 = vadd.f32 0.0, %v599
      %601 = vdwg.mxu0
      %v618 = vunpack.c.l.b16 %v423
      %v619 = vunpack.c.h.b16 %v423
      %v620 = vunpack.c.l.b16 %v424
      %v621 = vunpack.c.h.b16 %v424
      %v622 = vunpack.c.l.b16 %v425
      %v623 = vunpack.c.h.b16 %v425
      %v624 = vunpack.c.l.b16 %v426
      %v625 = vunpack.c.h.b16 %v426
      %v626 = vunpack.c.l.b16 %v427
      %v627 = vunpack.c.h.b16 %v427
      %v628 = vunpack.c.l.b16 %v428
      %v629 = vunpack.c.h.b16 %v428
      %v630 = vunpack.c.l.b16 %v429
      %v631 = vunpack.c.h.b16 %v429
      %v632 = vunpack.c.l.b16 %v430
      %v633 = vunpack.c.h.b16 %v430
      %v634 = vunpack.c.l.b16 %v431
      %v635 = vunpack.c.h.b16 %v431
      %v636 = vunpack.c.l.b16 %v432
      %v637 = vunpack.c.h.b16 %v432
      %v638 = vunpack.c.l.b16 %v433
      %v639 = vunpack.c.h.b16 %v433
      %v640 = vunpack.c.l.b16 %v434
      %v641 = vunpack.c.h.b16 %v434
      %v642 = vunpack.c.l.b16 %v435
      %v643 = vunpack.c.h.b16 %v435
      %v644 = vunpack.c.l.b16 %v436
      %v645 = vunpack.c.h.b16 %v436
      %v646 = vunpack.c.l.b16 %v437
      %v647 = vunpack.c.h.b16 %v437
      %v648 = vunpack.c.l.b16 %v438
      %v649 = vunpack.c.h.b16 %v438
      %v650 = vpack.c.b16 %v620, %v618
      %v651 = vpack.c.b16 %v621, %v619
      %v652 = vpack.c.b16 %v624, %v622
      %v653 = vpack.c.b16 %v625, %v623
      %v654 = vpack.c.b16 %v628, %v626
      %v655 = vpack.c.b16 %v629, %v627
      %v656 = vpack.c.b16 %v632, %v630
      %v657 = vpack.c.b16 %v633, %v631
      %v658 = vpack.c.b16 %v636, %v634
      %v659 = vpack.c.b16 %v637, %v635
      %v660 = vpack.c.b16 %v640, %v638
      %v661 = vpack.c.b16 %v641, %v639
      %v662 = vpack.c.b16 %v644, %v642
      %v663 = vpack.c.b16 %v645, %v643
      %v664 = vpack.c.b16 %v648, %v646
      %v665 = vpack.c.b16 %v649, %v647
      %682 = vmatprep.subr.bf16.mxu0 %v651
      %683 = vmatpush1.bf16.msra.mxu0 %v650
      %684 = vmatprep.subr.bf16.mxu0 %v653
      %685 = vmatpush1.bf16.msra.mxu0 %v652
      %686 = vmatprep.subr.bf16.mxu0 %v655
      %687 = vmatpush1.bf16.msra.mxu0 %v654
      %688 = vmatprep.subr.bf16.mxu0 %v657
      %689 = vmatpush1.bf16.msra.mxu0 %v656
      %690 = vmatprep.subr.bf16.mxu0 %v659
      %691 = vmatpush1.bf16.msra.mxu0 %v658
      %692 = vmatprep.subr.bf16.mxu0 %v661
      %693 = vmatpush1.bf16.msra.mxu0 %v660
      %694 = vmatprep.subr.bf16.mxu0 %v663
      %695 = vmatpush1.bf16.msra.mxu0 %v662
      %696 = vmatprep.subr.bf16.mxu0 %v665
      %697 = vmatpush1.bf16.msra.mxu0 %v664
      %698 = vmatprep.subr.bf16.mxu0 0
      %699 = vmatpush1.bf16.msra.mxu0 0
      %700 = vmatprep.subr.bf16.mxu0 0
      %701 = vmatpush1.bf16.msra.mxu0 0
      %702 = vmatprep.subr.bf16.mxu0 0
      %703 = vmatpush1.bf16.msra.mxu0 0
      %704 = vmatprep.subr.bf16.mxu0 0
      %705 = vmatpush1.bf16.msra.mxu0 0
      %706 = vmatprep.subr.bf16.mxu0 0
      %707 = vmatpush1.bf16.msra.mxu0 0
      %708 = vmatprep.subr.bf16.mxu0 0
      %709 = vmatpush1.bf16.msra.mxu0 0
      %710 = vmatprep.subr.bf16.mxu0 0
      %711 = vmatpush1.bf16.msra.mxu0 0
      %712 = vmatprep.subr.bf16.mxu0 0
      %713 = vmatpush1.bf16.msra.mxu0 0
      %714 = vmatprep.mubr.bf16.mxu0 0
      %715 = vmatmul.mubr.bf16.gmra.mrb[0].mxu0 %v477
      %v716 = vpop.f32.mrb[0].mxu0
      %v717 = vadd.f32 0.0, %v716
      %v718 = vpop.f32.mrb[0].mxu0
      %v719 = vadd.f32 0.0, %v718
      %v720 = vpop.f32.mrb[0].mxu0
      %v721 = vadd.f32 0.0, %v720
      %v722 = vpop.f32.mrb[0].mxu0
      %v723 = vadd.f32 0.0, %v722
      %724 = vdwg.mxu0
      %v725 = vxor.u32 %v594, 2147483648
      %v726 = vxor.u32 %v596, 2147483648
      %v727 = vxor.u32 %v598, 2147483648
      %v728 = vxor.u32 %v600, 2147483648
      %v729 = vmul.f32 %v725, 1.442695
      %v730 = vpow.pop %v729
      %v731 = vmul.f32 %v726, 1.442695
      %v732 = vpow.pop %v731
      %v733 = vmul.f32 %v727, 1.442695
      %v734 = vpow.pop %v733
      %v735 = vmul.f32 %v728, 1.442695
      %v736 = vpow.pop %v735
      %v737 = vadd.f32 %v730, 1.0
      %v738 = vadd.f32 %v732, 1.0
      %v739 = vadd.f32 %v734, 1.0
      %v740 = vadd.f32 %v736, 1.0
      %v741 = vrcp.pop %v737
      %v742 = vmul.f32 1.0, %v741
      %v743 = vrcp.pop %v738
      %v744 = vmul.f32 1.0, %v743
      %v745 = vrcp.pop %v739
      %v746 = vmul.f32 1.0, %v745
      %v747 = vrcp.pop %v740
      %v748 = vmul.f32 1.0, %v747
      %v749 = vmul.f32 %v594, %v742
      %v750 = vmul.f32 %v596, %v744
      %v751 = vmul.f32 %v598, %v746
      %v752 = vmul.f32 %v600, %v748
      %v753 = vmul.f32 %v749, %v717
      %v754 = vmul.f32 %v750, %v719
      %v755 = vmul.f32 %v751, %v721
      %v756 = vmul.f32 %v752, %v723
      %758 = vset.pattern.permute.xlu0 0
      %759 = vperm.xlu0 %758, %v471
      %v760 = vpop.permute.xlu0 %759
      %763 = vset.pattern.permute.xlu0 0
      %764 = vperm.xlu0 %763, %v472
      %v765 = vpop.permute.xlu0 %764
      %v767 = vmul.f32 %v753, %v760
      %v768 = vmul.f32 %v754, %v760
      %v769 = vmul.f32 %v755, %v765
      %v770 = vmul.f32 %v756, %v765
      %v771 = vld [vmem:[#allocation2] sm:$0xff]
      %v772 = vld [vmem:[#allocation2 + $0x8] sm:$0xff]
      %v773 = vpack.c.bf16 %v769, %v767
      %v774 = vpack.c.bf16 %v770, %v768
      %v807 = vunpack.c.l.b16 %v439
      %v808 = vunpack.c.l.b16 %v440
      %v809 = vunpack.c.l.b16 %v441
      %v810 = vunpack.c.l.b16 %v442
      %v811 = vunpack.c.l.b16 %v443
      %v812 = vunpack.c.l.b16 %v444
      %v813 = vunpack.c.l.b16 %v445
      %v814 = vunpack.c.l.b16 %v446
      %v815 = vunpack.c.l.b16 %v447
      %v816 = vunpack.c.l.b16 %v448
      %v817 = vunpack.c.l.b16 %v449
      %v818 = vunpack.c.l.b16 %v450
      %v819 = vunpack.c.l.b16 %v451
      %v820 = vunpack.c.l.b16 %v452
      %v821 = vunpack.c.l.b16 %v453
      %v822 = vunpack.c.l.b16 %v454
      %v823 = vunpack.c.l.b16 %v455
      %v824 = vunpack.c.l.b16 %v456
      %v825 = vunpack.c.l.b16 %v457
      %v826 = vunpack.c.l.b16 %v458
      %v827 = vunpack.c.l.b16 %v459
      %v828 = vunpack.c.l.b16 %v460
      %v829 = vunpack.c.l.b16 %v461
      %v830 = vunpack.c.l.b16 %v462
      %v831 = vunpack.c.l.b16 %v463
      %v832 = vunpack.c.l.b16 %v464
      %v833 = vunpack.c.l.b16 %v465
      %v834 = vunpack.c.l.b16 %v466
      %v835 = vunpack.c.l.b16 %v467
      %v836 = vunpack.c.l.b16 %v468
      %v837 = vunpack.c.l.b16 %v469
      %v838 = vunpack.c.l.b16 %v470
      %v839 = vpack.c.b16 %v808, %v807
      %v840 = vpack.c.b16 %v810, %v809
      %v841 = vpack.c.b16 %v812, %v811
      %v842 = vpack.c.b16 %v814, %v813
      %v843 = vpack.c.b16 %v816, %v815
      %v844 = vpack.c.b16 %v818, %v817
      %v845 = vpack.c.b16 %v820, %v819
      %v846 = vpack.c.b16 %v822, %v821
      %v847 = vpack.c.b16 %v824, %v823
      %v848 = vpack.c.b16 %v826, %v825
      %v849 = vpack.c.b16 %v828, %v827
      %v850 = vpack.c.b16 %v830, %v829
      %v851 = vpack.c.b16 %v832, %v831
      %v852 = vpack.c.b16 %v834, %v833
      %v853 = vpack.c.b16 %v836, %v835
      %v854 = vpack.c.b16 %v838, %v837
      %871 = vmatprep.subr.bf16.mxu0 0
      %872 = vmatpush1.bf16.msra.mxu0 %v839
      %873 = vmatprep.subr.bf16.mxu0 0
      %874 = vmatpush1.bf16.msra.mxu0 %v840
      %875 = vmatprep.subr.bf16.mxu0 0
      %876 = vmatpush1.bf16.msra.mxu0 %v841
      %877 = vmatprep.subr.bf16.mxu0 0
      %878 = vmatpush1.bf16.msra.mxu0 %v842
      %879 = vmatprep.subr.bf16.mxu0 0
      %880 = vmatpush1.bf16.msra.mxu0 %v843
      %881 = vmatprep.subr.bf16.mxu0 0
      %882 = vmatpush1.bf16.msra.mxu0 %v844
      %883 = vmatprep.subr.bf16.mxu0 0
      %884 = vmatpush1.bf16.msra.mxu0 %v845
      %885 = vmatprep.subr.bf16.mxu0 0
      %886 = vmatpush1.bf16.msra.mxu0 %v846
      %887 = vmatprep.subr.bf16.mxu0 0
      %888 = vmatpush1.bf16.msra.mxu0 %v847
      %889 = vmatprep.subr.bf16.mxu0 0
      %890 = vmatpush1.bf16.msra.mxu0 %v848
      %891 = vmatprep.subr.bf16.mxu0 0
      %892 = vmatpush1.bf16.msra.mxu0 %v849
      %893 = vmatprep.subr.bf16.mxu0 0
      %894 = vmatpush1.bf16.msra.mxu0 %v850
      %895 = vmatprep.subr.bf16.mxu0 0
      %896 = vmatpush1.bf16.msra.mxu0 %v851
      %897 = vmatprep.subr.bf16.mxu0 0
      %898 = vmatpush1.bf16.msra.mxu0 %v852
      %899 = vmatprep.subr.bf16.mxu0 0
      %900 = vmatpush1.bf16.msra.mxu0 %v853
      %901 = vmatprep.subr.bf16.mxu0 0
      %902 = vmatpush1.bf16.msra.mxu0 %v854
      %903 = vmatprep.mubr.bf16.mxu0 %v774
      %904 = vmatmul.mubr.bf16.gmra.mrb[0].mxu0 %v773
      %v905 = vpop.f32.mrb[0].mxu0
      %v906 = vadd.f32 0.0, %v905
      %v907 = vpop.f32.mrb[0].mxu0
      %v908 = vpop.f32.mrb[0].mxu0
      %v909 = vadd.f32 0.0, %v908
      %v910 = vpop.f32.mrb[0].mxu0
      %911 = vdwg.mxu0
      %v912 = vadd.f32 %v771, %v906
      %v913 = vadd.f32 %v772, %v909
      %914 = vst [vmem:[#allocation2] sm:$0xff] %v912
      %915 = vst [vmem:[#allocation2 + $0x8] sm:$0xff] %v913
      // Predicated region
      $region45: #{_lambda_.1} parent=39 // pred_check
        %p916 = pneg %p399
      $region46: #{_lambda_.1} parent=39 // pred_check_branch
        %918 = sbr.rel (%p916) target = $region48
      $region47: #{_lambda_.1} parent=39 // pred_region
        %v919 = vld [vmem:[#allocation2] sm:$0xff]
        %v920 = vld [vmem:[#allocation2 + $0x8] sm:$0xff]
        %921 = vst [vmem:[%s396] sm:$0xff] %v919
        %922 = vst [vmem:[%s396 + $0x8] sm:$0xff] %v920
      $region48: #{_lambda_.1} parent=39 // pred_fallthru
        _
      %s923 = smul.u32 2, %s27
      %p924 = scmp.lt.s32.totalorder %s923, 19
      %s925 = scalar_select %p924, %s923, 19
      %s926 = smul.addr %s925, 8
      %s927 = scalar_lea.vmem %s6, %s926
      // Predicated region
      $region49: #{_lambda_.1} parent=39 // pred_check
        %p928 = pneg %p195
      $region50: #{_lambda_.1} parent=39 // pred_check_branch
        %930 = sbr.rel (%p928) target = $region52
      $region51: #{_lambda_.1} parent=39 // pred_region
        %s931 = smul.u32 2, %s27
      $region52: #{_lambda_.1} parent=39 // pred_fallthru
        _
    $region40: #{_lambda_.1} parent=5 // pred_fallthru
      _
    %p932 = scmp.le.s32.totalorder 2, %s18
    // Predicated region
    $region53: #{_lambda_.1} parent=5 // pred_check
      %p933 = pneg %p932
    $region54: #{_lambda_.1} parent=5 // pred_check_branch
      %935 = sbr.rel (%p933) target = $region56
    $region55: #{_lambda_.1} parent=5 // pred_region
      %s936 = ssub.s32 %s18, 2
      // Predicated region
      $region57: #{_lambda_.1} parent=55 // pred_check
        %p937 = pneg %p201
      $region58: #{_lambda_.1} parent=55 // pred_check_branch
        %939 = sbr.rel (%p937) target = $region60
      $region59: #{_lambda_.1} parent=55 // pred_region
        %s940 = smul.u32 2, %s29
        %p941 = scmp.lt.s32.totalorder %s940, 19
        %s942 = scalar_select %p941, %s940, 19
        %s943 = smul.addr %s942, 8
        %s944 = scalar_lea.vmem %s6, %s943
      $region60: #{_lambda_.1} parent=55 // pred_fallthru
        _
    $region56: #{_lambda_.1} parent=5 // pred_fallthru
      _
  $region6: #{_lambda_.1} parent=0 // loop_footer
    %s22 = sadd.s32 1, %s18
  $region7: #{_lambda_.1} parent=0 // loop_footer_branch
    %17 = sbr.rel target = $region3
  $region8: #{_lambda_.1} parent=0 // loop_exit
    _

</llo_original>
